<compile_context>
chip_gen: v7x
topology: tpu7x:2x2x1
jax: 0.10.0
libtpu: 0.0.40
codegen_flags: <defaults>
</compile_context>

<pallas_src>
import functools

import jax
import jax.numpy as jnp
from jax.experimental import pallas as pl
from jax.experimental.pallas import tpu as pltpu


_TM_MAX = 1024     # M-tile cap (multiple of 128)


def _round_up(x, mult):
    return (x + mult - 1) // mult * mult


def _pick_tm(m):
    """M-tile size: multiple of 8, >=2 grid steps when feasible, <= _TM_MAX."""
    if m >= 2 * _TM_MAX:
        return _TM_MAX
    half = -(-m // 2)                       # ceil(m / 2) -> at least 2 tiles
    half = _round_up(half, 128) if half >= 128 else _round_up(half, 8)
    return max(8, min(_TM_MAX, half))


def _resident_spec(block_shape):
    """Constant-index weight/bias spec; single-buffered when the API allows."""
    index_map = lambda i: (0, 0)
    try:
        return pl.BlockSpec(block_shape, index_map, pipeline_mode=pl.Buffered(1))
    except (TypeError, AttributeError):
        return pl.BlockSpec(block_shape, index_map)


def _vmem_limit_bytes(tm, dim, act_itemsize, out_itemsize):
    need = (2 * tm * dim * act_itemsize       # double-buffered x tiles
            + 2 * tm * out_itemsize           # double-buffered (tm, 1) logits tiles
            + dim * dim * act_itemsize        # resident dense weight (single-buffer)
            + (2 * dim + 1) * 4               # biases + classifier row (f32)
            + tm * dim * 4)                   # f32 dense intermediate (compiler temp)
    # 2x margin for Mosaic internals; cap below v7x's 64 MiB physical VMEM.
    return int(min(max(2 * need, 8 << 20), 48 << 20))


def disc_head_kernel(x_ref, w1_ref, b1_ref, w2_ref, b2_ref, o_ref):
    # x_ref:  (TM, D)   activation tile (pipelined)
    # w1_ref: (D, D)    dense weight in (in, out) layout -> NN matmul, no transpose
    # b1_ref: (1, D)    dense bias (f32)
    # w2_ref: (1, D)    classifier weight row (f32)
    # b2_ref: (1, 1)    classifier bias (f32)
    # o_ref:  (TM, 1)   logits tile
    h = jnp.dot(x_ref[...], w1_ref[...],
                preferred_element_type=jnp.float32) + b1_ref[...]
    # classifier: per-row dot with a single weight row -> VPU multiply + XLU
    # lane reduction (frees the MXU from a 1-useful-column pass group).
    logit = jnp.sum(h * w2_ref[...], axis=-1, keepdims=True) + b2_ref[...]
    o_ref[...] = logit.astype(o_ref.dtype)


@functools.partial(jax.jit, static_argnames=("mxu_dtype",))
def discriminator_head(hidden_states, w_dense, b_dense, w_cls, b_cls, *,
                       mxu_dtype=None):
    """hidden_states: (batch, seq, dim) -> logits (batch, seq, 1).

    Weights in PyTorch nn.Linear layout: w_dense (dim, dim), b_dense (dim,),
    w_cls (1, dim), b_cls (1,).  `mxu_dtype` (e.g. jnp.bfloat16) optionally
    narrows the MXU feed while keeping f32 accumulation.
    """
    batch, seq, dim = hidden_states.shape
    m = batch * seq
    out_dt = hidden_states.dtype
    mdt = jnp.dtype(mxu_dtype) if mxu_dtype is not None else jnp.dtype(out_dt)

    x2d = hidden_states.reshape(m, dim).astype(mdt)
    # One-time HBM transpose to (in, out): kernel matmul is then NN-form.
    w1 = w_dense.T.astype(mdt)                        # (dim_in, dim_out)
    b1 = b_dense.astype(jnp.float32).reshape(1, dim)
    w2 = w_cls.astype(jnp.float32).reshape(1, dim)    # single classifier row
    b2 = b_cls.astype(jnp.float32).reshape(1, 1)

    tm = _pick_tm(m)
    grid = (pl.cdiv(m, tm),)

    act_isz = jnp.dtype(mdt).itemsize
    out_isz = jnp.dtype(out_dt).itemsize

    out2d = pl.pallas_call(
        disc_head_kernel,
        out_shape=jax.ShapeDtypeStruct((m, 1), out_dt),
        grid=grid,
        in_specs=[
            pl.BlockSpec((tm, dim), lambda i: (i, 0)),   # x tile (pipelined)
            _resident_spec((dim, dim)),                  # dense W  (VMEM-resident)
            _resident_spec((1, dim)),                    # dense bias
            _resident_spec((1, dim)),                    # classifier weight row
            _resident_spec((1, 1)),                      # classifier bias
        ],
        out_specs=pl.BlockSpec((tm, 1), lambda i: (i, 0)),
        compiler_params=pltpu.CompilerParams(
            dimension_semantics=("parallel",),
            vmem_limit_bytes=_vmem_limit_bytes(tm, dim, act_isz, out_isz),
        ),
        cost_estimate=pl.CostEstimate(
            flops=2 * m * dim * dim + 3 * m * dim,
            transcendentals=0,
            bytes_accessed=(m * dim + dim * dim) * act_isz
                           + (2 * dim + 1) * 4 + m * out_isz,
        ),
    )(x2d, w1, b1, w2, b2)

    return out2d.reshape(batch, seq, 1)


if __name__ == "__main__":
    # Small, module-consistent shapes.
    batch, seq, dim = 2, 8, 32

    key = jax.random.PRNGKey(0)
    kx, kw1, kb1, kw2, kb2 = jax.random.split(key, 5)

    x = jax.random.normal(kx, (batch, seq, dim), dtype=jnp.float32)

    # PyTorch nn.Linear layouts: weight (out, in), bias (out,).
    w_dense = jax.random.normal(kw1, (dim, dim), dtype=jnp.float32) * 0.02
    b_dense = jax.random.normal(kb1, (dim,), dtype=jnp.float32) * 0.02
    w_cls = jax.random.normal(kw2, (1, dim), dtype=jnp.float32) * 0.02
    b_cls = jax.random.normal(kb2, (1,), dtype=jnp.float32) * 0.02

    logits = discriminator_head(x, w_dense, b_dense, w_cls, b_cls)
    logits = jax.block_until_ready(logits)

    # Plain-JAX reference of the same math (dense -> classifier, no activation).
    ref = (x @ w_dense.T + b_dense) @ w_cls.T + b_cls

    assert logits.shape == (batch, seq, 1), logits.shape
    assert jnp.allclose(logits, ref, atol=1e-5, rtol=1e-5), (
        float(jnp.max(jnp.abs(logits - ref))))

    print("KERNEL_OK")
</pallas_src>

<mosaic_0001>
module attributes {stable_mosaic.version = 11 : i64} {
  func.func @disc_head_kernel(%arg0: i32, %arg1: memref<8x32xf32, #tpu.memory_space<vmem>>, %arg2: memref<32x32xf32, #tpu.memory_space<vmem>>, %arg3: memref<1x32xf32, #tpu.memory_space<vmem>>, %arg4: memref<1x32xf32, #tpu.memory_space<vmem>>, %arg5: memref<1x1xf32, #tpu.memory_space<vmem>>, %arg6: memref<8x1xf32, #tpu.memory_space<vmem>>) attributes {dimension_semantics = [#tpu.dimension_semantics<parallel>], iteration_bounds = array<i64: 2>, scalar_prefetch = 0 : i64, scratch_operands = 0 : i64, tpu.core_type = #tpu.core_type<tc>, window_params = [{transform_indices = @transform_0, window_bounds = array<i64: 8, 32>}, {pipeline_mode = #tpu.pipeline_mode<synchronous>, transform_indices = @transform_1, window_bounds = array<i64: 32, 32>}, {pipeline_mode = #tpu.pipeline_mode<synchronous>, transform_indices = @transform_2, window_bounds = array<i64: 1, 32>}, {pipeline_mode = #tpu.pipeline_mode<synchronous>, transform_indices = @transform_3, window_bounds = array<i64: 1, 32>}, {pipeline_mode = #tpu.pipeline_mode<synchronous>, transform_indices = @transform_4, window_bounds = array<i64: 1, 1>}, {transform_indices = @transform_5, window_bounds = array<i64: 8, 1>}]} {
    %c0 = arith.constant 0 : index
    %c0_0 = arith.constant 0 : index
    %0 = vector.load %arg1[%c0, %c0_0] : memref<8x32xf32, #tpu.memory_space<vmem>>, vector<8x32xf32>
    %c0_1 = arith.constant 0 : index
    %c0_2 = arith.constant 0 : index
    %1 = vector.load %arg2[%c0_1, %c0_2] : memref<32x32xf32, #tpu.memory_space<vmem>>, vector<32x32xf32>
    %cst = arith.constant dense<0.000000e+00> : vector<8x32xf32>
    %2 = tpu.matmul %0, %1, %cst {dimension_numbers = #tpu.dot_dimension_numbers<[1], [0], [0], [1], [0, 0, 1, 1], [], []>} : vector<8x32xf32>, vector<32x32xf32>, vector<8x32xf32> -> vector<8x32xf32>
    %c0_3 = arith.constant 0 : index
    %c0_4 = arith.constant 0 : index
    %3 = vector.load %arg3[%c0_3, %c0_4] : memref<1x32xf32, #tpu.memory_space<vmem>>, vector<1x32xf32>
    %4 = vector.broadcast %3 : vector<1x32xf32> to vector<8x32xf32>
    %5 = arith.addf %2, %4 : vector<8x32xf32>
    %c0_5 = arith.constant 0 : index
    %c0_6 = arith.constant 0 : index
    %6 = vector.load %arg4[%c0_5, %c0_6] : memref<1x32xf32, #tpu.memory_space<vmem>>, vector<1x32xf32>
    %7 = vector.broadcast %6 : vector<1x32xf32> to vector<8x32xf32>
    %8 = arith.mulf %5, %7 : vector<8x32xf32>
    %cst_7 = arith.constant dense<0.000000e+00> : vector<8xf32>
    %9 = vector.multi_reduction <add>, %8, %cst_7 [1] : vector<8x32xf32> to vector<8xf32>
    %10 = vector.shape_cast %9 : vector<8xf32> to vector<8x1xf32>
    %c0_8 = arith.constant 0 : index
    %c0_9 = arith.constant 0 : index
    %11 = vector.load %arg5[%c0_8, %c0_9] : memref<1x1xf32, #tpu.memory_space<vmem>>, vector<1x1xf32>
    %12 = vector.broadcast %11 : vector<1x1xf32> to vector<8x1xf32>
    %13 = arith.addf %10, %12 : vector<8x1xf32>
    %c0_10 = arith.constant 0 : index
    %c0_11 = arith.constant 0 : index
    %14 = vector.load %arg6[%c0_10, %c0_11] : memref<8x1xf32, #tpu.memory_space<vmem>>, vector<8x1xf32>
    tpu.vector_store %arg6[%c0_10, %c0_11], %13 {strides = array<i32>} : memref<8x1xf32, #tpu.memory_space<vmem>>, vector<8x1xf32>,
    return
  }
  func.func @transform_0(%arg0: i32) -> (i32, i32) {
    %c0_i32 = arith.constant 0 : i32
    %c0_i32_0 = arith.constant 0 : i32
    return %arg0, %c0_i32 : i32, i32
  }
  func.func @transform_1(%arg0: i32) -> (i32, i32) {
    %c0_i32 = arith.constant 0 : i32
    %c0_i32_0 = arith.constant 0 : i32
    %c0_i32_1 = arith.constant 0 : i32
    return %c0_i32, %c0_i32_0 : i32, i32
  }
  func.func @transform_2(%arg0: i32) -> (i32, i32) {
    %c0_i32 = arith.constant 0 : i32
    %c0_i32_0 = arith.constant 0 : i32
    %c0_i32_1 = arith.constant 0 : i32
    return %c0_i32, %c0_i32_0 : i32, i32
  }
  func.func @transform_3(%arg0: i32) -> (i32, i32) {
    %c0_i32 = arith.constant 0 : i32
    %c0_i32_0 = arith.constant 0 : i32
    %c0_i32_1 = arith.constant 0 : i32
    return %c0_i32, %c0_i32_0 : i32, i32
  }
  func.func @transform_4(%arg0: i32) -> (i32, i32) {
    %c0_i32 = arith.constant 0 : i32
    %c0_i32_0 = arith.constant 0 : i32
    %c0_i32_1 = arith.constant 0 : i32
    return %c0_i32, %c0_i32_0 : i32, i32
  }
  func.func @transform_5(%arg0: i32) -> (i32, i32) {
    %c0_i32 = arith.constant 0 : i32
    %c0_i32_0 = arith.constant 0 : i32
    return %arg0, %c0_i32 : i32, i32
  }
}

</mosaic_0001>

<llo_original>
// kernel: discriminator_head.1
$region0: #{discriminator_head.1}
  #allocation0 [shape = 'u32[]', space=smem, size = 0x4, offset = 0x4, fixed_abs, tag = 'smem constant byte address 0x4 - core index']
  #allocation1 [shape = 'u32[144,128]{1,0:T(1,128)}', space=vmem, size = 0x12000, scoped, tag = 'internal scratch']
  #allocation2 [shape = 'f32[1,1]{1,0:T(1,128)S(1)}', space=vmem, size = 0x200, scoped, tag = 'scoped memory for discriminator_head.1']
  %s0 = inlined_call_operand.vmem [shape: f32[16,32], index: 0, kind: input, shape index: {}]
  %s1 = inlined_call_operand.vmem [shape: f32[32,32], index: 1, kind: input, shape index: {}]
  %s2 = inlined_call_operand.vmem [shape: f32[1,32], index: 2, kind: input, shape index: {}]
  %s3 = inlined_call_operand.vmem [shape: f32[1,32], index: 3, kind: input, shape index: {}]
  %s4 = inlined_call_operand.<no memory space> [shape: f32[1,1], index: 4, kind: input, shape index: {}]
  %s5 = inlined_call_operand.vmem [shape: f32[16,1], index: 5, kind: output, shape index: {}]
  %s6 = sld [smem:[#allocation0]]
  $region53: #{discriminator_head.1} parent=0
    _
  %s8 = ssub.s32 1, %s6
  %s9 = scalar_select 0, %s8, %s6
  %v10 = vstv %s4
  %11 = vst [vmem:[#allocation2] sm:$0x1] %v10
  loop: start=0, step=1, limit=4
  $region2: #{discriminator_head.1} parent=0 // loop_pre_header
    _
  $region3: #{discriminator_head.1} parent=0 // loop_header
    %s13 = sphi 0, %s17
    %p14 = scmp.ge.s32.totalorder %s13, 4
    %s23 = sphi 0, %s25
    %s26 = sphi 0, %s23
    %s27 = sphi 0, %s26
    %s43 = sphi 0, %s27
    %s47 = sphi 0, %s47
    %s49 = sphi 0, %s47
    %s50 = sphi 0, %s49
    %s64 = sphi 0, %s50
    %s68 = sphi 0, %s68
    %s70 = sphi 0, %s68
    %s71 = sphi 0, %s70
    %s85 = sphi 0, %s71
    %s89 = sphi 0, %s89
    %s91 = sphi 0, %s89
    %s92 = sphi 0, %s91
    %s106 = sphi 0, %s92
    %s110 = sphi 0, %s110
    %s112 = sphi 0, %s110
    %s113 = sphi 0, %s112
    %s127 = sphi 0, %s113
    %s133 = sphi 0, %s135
    %s136 = sphi 0, %s133
    %s137 = sphi 0, %s136
    %s153 = sphi 0, %s137
  $region4: #{discriminator_head.1} parent=0 // loop_header_branch
    %16 = sbr.rel (%p14) target = $region8
  $region5: #{discriminator_head.1} parent=0 // loop_body
    %s18 = ssub.s32 %s13, 1
    %s19 = ssub.s32 %s13, 2
    %s20 = sadd.s32 %s13, 1
    %s21 = ssub.s32 %s13, %s20
    %p22 = scmp.eq.s32.totalorder %s21, 0
    %s24 = sadd.s32 %s23, 1
    %s25 = scalar_select %p22, %s23, %s24
    %p28 = pneg %p22
    %p29 = scmp.eq.s32.totalorder %s13, 1
    %p30 = por %p28, %p29
    %p31 = scmp.ne.s32.totalorder %s23, %s26
    %p32 = scmp.eq.s32.totalorder %s13, 0
    %p33 = por %p31, %p32
    %p34 = scmp.ne.s32.totalorder %s23, %s26
    %p35 = scmp.eq.s32.totalorder %s18, 1
    %p36 = por %p34, %p35
    %p37 = scmp.ne.s32.totalorder %s26, %s27
    %p38 = scmp.eq.s32.totalorder %s18, 0
    %p39 = por %p37, %p38
    %p40 = scmp.ne.s32.totalorder %s26, %s27
    %p41 = scmp.eq.s32.totalorder %s19, 1
    %p42 = por %p40, %p41
    %p44 = scmp.ne.s32.totalorder %s27, %s43
    %p45 = scmp.eq.s32.totalorder %s19, 0
    %p46 = por %p44, %p45
    %s48 = sadd.s32 %s47, 1
    %p51 = scmp.eq.s32.totalorder %s13, 1
    %p52 = scmp.ne.s32.totalorder %s47, %s49
    %p53 = scmp.eq.s32.totalorder %s13, 0
    %p54 = por %p52, %p53
    %p55 = scmp.ne.s32.totalorder %s47, %s49
    %p56 = scmp.eq.s32.totalorder %s18, 1
    %p57 = por %p55, %p56
    %p58 = scmp.ne.s32.totalorder %s49, %s50
    %p59 = scmp.eq.s32.totalorder %s18, 0
    %p60 = por %p58, %p59
    %p61 = scmp.ne.s32.totalorder %s49, %s50
    %p62 = scmp.eq.s32.totalorder %s19, 1
    %p63 = por %p61, %p62
    %p65 = scmp.ne.s32.totalorder %s50, %s64
    %p66 = scmp.eq.s32.totalorder %s19, 0
    %p67 = por %p65, %p66
    %s69 = sadd.s32 %s68, 1
    %p72 = scmp.eq.s32.totalorder %s13, 1
    %p73 = scmp.ne.s32.totalorder %s68, %s70
    %p74 = scmp.eq.s32.totalorder %s13, 0
    %p75 = por %p73, %p74
    %p76 = scmp.ne.s32.totalorder %s68, %s70
    %p77 = scmp.eq.s32.totalorder %s18, 1
    %p78 = por %p76, %p77
    %p79 = scmp.ne.s32.totalorder %s70, %s71
    %p80 = scmp.eq.s32.totalorder %s18, 0
    %p81 = por %p79, %p80
    %p82 = scmp.ne.s32.totalorder %s70, %s71
    %p83 = scmp.eq.s32.totalorder %s19, 1
    %p84 = por %p82, %p83
    %p86 = scmp.ne.s32.totalorder %s71, %s85
    %p87 = scmp.eq.s32.totalorder %s19, 0
    %p88 = por %p86, %p87
    %s90 = sadd.s32 %s89, 1
    %p93 = scmp.eq.s32.totalorder %s13, 1
    %p94 = scmp.ne.s32.totalorder %s89, %s91
    %p95 = scmp.eq.s32.totalorder %s13, 0
    %p96 = por %p94, %p95
    %p97 = scmp.ne.s32.totalorder %s89, %s91
    %p98 = scmp.eq.s32.totalorder %s18, 1
    %p99 = por %p97, %p98
    %p100 = scmp.ne.s32.totalorder %s91, %s92
    %p101 = scmp.eq.s32.totalorder %s18, 0
    %p102 = por %p100, %p101
    %p103 = scmp.ne.s32.totalorder %s91, %s92
    %p104 = scmp.eq.s32.totalorder %s19, 1
    %p105 = por %p103, %p104
    %p107 = scmp.ne.s32.totalorder %s92, %s106
    %p108 = scmp.eq.s32.totalorder %s19, 0
    %p109 = por %p107, %p108
    %s111 = sadd.s32 %s110, 1
    %p114 = scmp.eq.s32.totalorder %s13, 1
    %p115 = scmp.ne.s32.totalorder %s110, %s112
    %p116 = scmp.eq.s32.totalorder %s13, 0
    %p117 = por %p115, %p116
    %p118 = scmp.ne.s32.totalorder %s110, %s112
    %p119 = scmp.eq.s32.totalorder %s18, 1
    %p120 = por %p118, %p119
    %p121 = scmp.ne.s32.totalorder %s112, %s113
    %p122 = scmp.eq.s32.totalorder %s18, 0
    %p123 = por %p121, %p122
    %p124 = scmp.ne.s32.totalorder %s112, %s113
    %p125 = scmp.eq.s32.totalorder %s19, 1
    %p126 = por %p124, %p125
    %p128 = scmp.ne.s32.totalorder %s113, %s127
    %p129 = scmp.eq.s32.totalorder %s19, 0
    %p130 = por %p128, %p129
    %s131 = ssub.s32 %s13, %s20
    %p132 = scmp.eq.s32.totalorder %s131, 0
    %s134 = sadd.s32 %s133, 1
    %s135 = scalar_select %p132, %s133, %s134
    %p138 = pneg %p132
    %p139 = scmp.eq.s32.totalorder %s13, 1
    %p140 = por %p138, %p139
    %p141 = scmp.ne.s32.totalorder %s133, %s136
    %p142 = scmp.eq.s32.totalorder %s13, 0
    %p143 = por %p141, %p142
    %p144 = scmp.ne.s32.totalorder %s133, %s136
    %p145 = scmp.eq.s32.totalorder %s18, 1
    %p146 = por %p144, %p145
    %p147 = scmp.ne.s32.totalorder %s136, %s137
    %p148 = scmp.eq.s32.totalorder %s18, 0
    %p149 = por %p147, %p148
    %p150 = scmp.ne.s32.totalorder %s136, %s137
    %p151 = scmp.eq.s32.totalorder %s19, 1
    %p152 = por %p150, %p151
    %p154 = scmp.ne.s32.totalorder %s137, %s153
    %p155 = scmp.eq.s32.totalorder %s19, 0
    %p156 = por %p154, %p155
    %p157 = scmp.le.s32.totalorder 1, %s13
    %p158 = scmp.lt.s32.totalorder %s13, 3
    %p159 = pnand %p157, %p158
    %p160 = pneg %p159
    // Predicated region
    $region9: #{discriminator_head.1} parent=5 // pred_check
      _
    $region10: #{discriminator_head.1} parent=5 // pred_check_branch
      %162 = sbr.rel (%p159) target = $region12
    $region11: #{discriminator_head.1} parent=5 // pred_region
      %s163 = ssub.s32 %s13, 1
      // Predicated region
      $region13: #{discriminator_head.1} parent=11 // pred_check
        %p164 = pneg %p60
      $region14: #{discriminator_head.1} parent=11 // pred_check_branch
        %166 = sbr.rel (%p164) target = $region16
      $region15: #{discriminator_head.1} parent=11 // pred_region
        _
      $region16: #{discriminator_head.1} parent=11 // pred_fallthru
        _
      // Predicated region
      $region17: #{discriminator_head.1} parent=11 // pred_check
        %p167 = pneg %p81
      $region18: #{discriminator_head.1} parent=11 // pred_check_branch
        %169 = sbr.rel (%p167) target = $region20
      $region19: #{discriminator_head.1} parent=11 // pred_region
        _
      $region20: #{discriminator_head.1} parent=11 // pred_fallthru
        _
      // Predicated region
      $region21: #{discriminator_head.1} parent=11 // pred_check
        %p170 = pneg %p102
      $region22: #{discriminator_head.1} parent=11 // pred_check_branch
        %172 = sbr.rel (%p170) target = $region24
      $region23: #{discriminator_head.1} parent=11 // pred_region
        _
      $region24: #{discriminator_head.1} parent=11 // pred_fallthru
        _
      // Predicated region
      $region25: #{discriminator_head.1} parent=11 // pred_check
        %p173 = pneg %p123
      $region26: #{discriminator_head.1} parent=11 // pred_check_branch
        %175 = sbr.rel (%p173) target = $region28
      $region27: #{discriminator_head.1} parent=11 // pred_region
        _
      $region28: #{discriminator_head.1} parent=11 // pred_fallthru
        _
    $region12: #{discriminator_head.1} parent=5 // pred_fallthru
      _
    %p176 = scmp.lt.s32.totalorder %s13, 2
    // Predicated region
    $region29: #{discriminator_head.1} parent=5 // pred_check
      %p177 = pneg %p176
    $region30: #{discriminator_head.1} parent=5 // pred_check_branch
      %179 = sbr.rel (%p177) target = $region32
    $region31: #{discriminator_head.1} parent=5 // pred_region
      // Predicated region
      $region33: #{discriminator_head.1} parent=31 // pred_check
        %p180 = pneg %p33
      $region34: #{discriminator_head.1} parent=31 // pred_check_branch
        %182 = sbr.rel (%p180) target = $region36
      $region35: #{discriminator_head.1} parent=31 // pred_region
        %p183 = scmp.lt.s32.totalorder %s13, 1
        %s184 = scalar_select %p183, %s13, 1
        %s185 = smul.addr %s184, 8
        %s186 = scalar_lea.vmem %s0, %s185
      $region36: #{discriminator_head.1} parent=31 // pred_fallthru
        _
    $region32: #{discriminator_head.1} parent=5 // pred_fallthru
      _
    %p187 = scmp.le.s32.totalorder 1, %s13
    %p188 = scmp.lt.s32.totalorder %s13, 3
    %p189 = pnand %p187, %p188
    %p190 = pneg %p189
    // Predicated region
    $region37: #{discriminator_head.1} parent=5 // pred_check
      _
    $region38: #{discriminator_head.1} parent=5 // pred_check_branch
      %192 = sbr.rel (%p189) target = $region40
    $region39: #{discriminator_head.1} parent=5 // pred_region
      %s193 = ssub.s32 %s13, 1
      %p194 = scmp.lt.s32.totalorder %s18, 1
      %s195 = scalar_select %p194, %s18, 1
      %s196 = smul.addr %s195, 8
      %s197 = scalar_lea.vmem %s0, %s196
      %p198 = pneg %p39
      %p199 = pneg %p36
      %p200 = pneg %p60
      %p201 = pneg %p57
      %p202 = pneg %p81
      %p203 = pneg %p78
      %p204 = pneg %p102
      %p205 = pneg %p99
      %p206 = pneg %p123
      %p207 = pneg %p120
      %p208 = pneg %p149
      %p209 = pneg %p146
      %p210 = scmp.lt.s32.totalorder %s18, 1
      %s211 = scalar_select %p210, %s18, 1
      %s212 = smul.addr %s211, 8
      %s213 = scalar_lea.vmem %s5, %s212
      %p214 = scmp.lt.s32.totalorder %s18, 1
      %s215 = scalar_select %p214, %s18, 1
      %s216 = smul.addr %s215, 8
      %s217 = scalar_lea.vmem %s0, %s216
      %p218 = scmp.lt.s32.totalorder %s18, 1
      %s219 = scalar_select %p218, %s18, 1
      %s220 = smul.addr %s219, 8
      %s221 = scalar_lea.vmem %s5, %s220
      %v222 = vld [vmem:[%s217] sm:$0xff]
      %v223 = vld [vmem:[%s1] sm:$0xff]
      %v224 = vld [vmem:[%s1 + $0x8] sm:$0xff]
      %v225 = vld [vmem:[%s1 + $0x10] sm:$0xff]
      %v226 = vld [vmem:[%s1 + $0x18] sm:$0xff]
      %v227 = vld [vmem:[%s2] sm:$0x1]
      %v229 = vlaneseq
      %v230 = vshrl.u32 %v229, 7
      %v231 = vsub.s32 0, %v230
      %v232 = vrot.slane %v227, %v231
      %vm234 = vcmask 261120
      %v236 = vsel %vm234, %v222, 0
      %238 = vmatprep.subr.mxu0 0.0
      %239 = vmatpush1.msra.mxu0 %v223
      %240 = vmatprep.subr.mxu0 0.0
      %241 = vmatpush1.msra.mxu0 %v224
      %242 = vmatprep.subr.mxu0 0.0
      %243 = vmatpush1.msra.mxu0 %v225
      %244 = vmatprep.subr.mxu0 0.0
      %245 = vmatpush1.msra.mxu0 %v226
      %246 = vmatprep.subr.mxu0 0.0
      %247 = vmatpush1.msra.mxu0 0.0
      %248 = vmatprep.subr.mxu0 0.0
      %249 = vmatpush1.msra.mxu0 0.0
      %250 = vmatprep.subr.mxu0 0.0
      %251 = vmatpush1.msra.mxu0 0.0
      %252 = vmatprep.subr.mxu0 0.0
      %253 = vmatpush1.msra.mxu0 0.0
      %254 = vmatprep.subr.mxu0 0.0
      %255 = vmatpush1.msra.mxu0 0.0
      %256 = vmatprep.subr.mxu0 0.0
      %257 = vmatpush1.msra.mxu0 0.0
      %258 = vmatprep.subr.mxu0 0.0
      %259 = vmatpush1.msra.mxu0 0.0
      %260 = vmatprep.subr.mxu0 0.0
      %261 = vmatpush1.msra.mxu0 0.0
      %262 = vmatprep.subr.mxu0 0.0
      %263 = vmatpush1.msra.mxu0 0.0
      %264 = vmatprep.subr.mxu0 0.0
      %265 = vmatpush1.msra.mxu0 0.0
      %266 = vmatprep.subr.mxu0 0.0
      %267 = vmatpush1.msra.mxu0 0.0
      %268 = vmatprep.subr.mxu0 0.0
      %269 = vmatpush1.msra.mxu0 0.0
      %270 = vmatprep.subr.mxu0 0.0
      %271 = vmatpush1.msra.mxu0 0.0
      %272 = vmatprep.subr.mxu0 0.0
      %273 = vmatpush1.msra.mxu0 0.0
      %274 = vmatprep.subr.mxu0 0.0
      %275 = vmatpush1.msra.mxu0 0.0
      %276 = vmatprep.subr.mxu0 0.0
      %277 = vmatpush1.msra.mxu0 0.0
      %278 = vmatprep.subr.mxu0 0.0
      %279 = vmatpush1.msra.mxu0 0.0
      %280 = vmatprep.subr.mxu0 0.0
      %281 = vmatpush1.msra.mxu0 0.0
      %282 = vmatprep.subr.mxu0 0.0
      %283 = vmatpush1.msra.mxu0 0.0
      %284 = vmatprep.subr.mxu0 0.0
      %285 = vmatpush1.msra.mxu0 0.0
      %286 = vmatprep.subr.mxu0 0.0
      %287 = vmatpush1.msra.mxu0 0.0
      %288 = vmatprep.subr.mxu0 0.0
      %289 = vmatpush1.msra.mxu0 0.0
      %290 = vmatprep.subr.mxu0 0.0
      %291 = vmatpush1.msra.mxu0 0.0
      %292 = vmatprep.subr.mxu0 0.0
      %293 = vmatpush1.msra.mxu0 0.0
      %294 = vmatprep.subr.mxu0 0.0
      %295 = vmatpush1.msra.mxu0 0.0
      %296 = vmatprep.subr.mxu0 0.0
      %297 = vmatpush1.msra.mxu0 0.0
      %298 = vmatprep.subr.mxu0 0.0
      %299 = vmatpush1.msra.mxu0 0.0
      %300 = vmatprep.subr.mxu0 0.0
      %301 = vmatpush1.msra.mxu0 0.0
      %302 = vmatprep.mubr.f32.mxu0 0.0
      %303 = vmatmul.mubr.f32.gmra.mrb[0].mxu0 %v236
      %v304 = vpop.f32.mrb[0].mxu0
      %v305 = vadd.f32 %v232, %v304
      %v306 = vpop.f32.mrb[0].mxu0
      %307 = vdwg.mxu0
      %v308 = vld [vmem:[%s3] sm:$0x1]
      %v310 = vlaneseq
      %v311 = vshrl.u32 %v310, 7
      %v312 = vsub.s32 0, %v311
      %v313 = vrot.slane %v308, %v312
      %v315 = vmul.f32 %v305, %v313
      %v316 = vsel %vm234, %v315, 0.0
      %317 = vadd.xlane.f32.xlu0 %v316
      %v318 = vpop.xlane.xlu0 %317
      %v319 = vld [vmem:[#allocation2] sm:$0x1]
      %v321 = vlaneseq
      %v322 = vshrl.u32 %v321, 7
      %v323 = vsub.s32 0, %v322
      %v324 = vrot.slane %v319, %v323
      %v326 = vadd.f32 %v318, %v324
      %vm327 = vcmask 7168
      %328 = vst.msk [vmem:[%s221] sm:$0xff] %vm327, %v326
      %p329 = scmp.lt.s32.totalorder %s18, 1
      %s330 = scalar_select %p329, %s18, 1
      %s331 = smul.addr %s330, 8
      %s332 = scalar_lea.vmem %s5, %s331
      // Predicated region
      $region41: #{discriminator_head.1} parent=39 // pred_check
        %p333 = pneg %p146
      $region42: #{discriminator_head.1} parent=39 // pred_check_branch
        %335 = sbr.rel (%p333) target = $region44
      $region43: #{discriminator_head.1} parent=39 // pred_region
        _
      $region44: #{discriminator_head.1} parent=39 // pred_fallthru
        _
    $region40: #{discriminator_head.1} parent=5 // pred_fallthru
      _
    %p336 = scmp.le.s32.totalorder 2, %s13
    // Predicated region
    $region45: #{discriminator_head.1} parent=5 // pred_check
      %p337 = pneg %p336
    $region46: #{discriminator_head.1} parent=5 // pred_check_branch
      %339 = sbr.rel (%p337) target = $region48
    $region47: #{discriminator_head.1} parent=5 // pred_region
      %s340 = ssub.s32 %s13, 2
      // Predicated region
      $region49: #{discriminator_head.1} parent=47 // pred_check
        %p341 = pneg %p152
      $region50: #{discriminator_head.1} parent=47 // pred_check_branch
        %343 = sbr.rel (%p341) target = $region52
      $region51: #{discriminator_head.1} parent=47 // pred_region
        %p344 = scmp.lt.s32.totalorder %s19, 1
        %s345 = scalar_select %p344, %s19, 1
        %s346 = smul.addr %s345, 8
        %s347 = scalar_lea.vmem %s5, %s346
      $region52: #{discriminator_head.1} parent=47 // pred_fallthru
        _
    $region48: #{discriminator_head.1} parent=5 // pred_fallthru
      _
  $region6: #{discriminator_head.1} parent=0 // loop_footer
    %s17 = sadd.s32 1, %s13
  $region7: #{discriminator_head.1} parent=0 // loop_footer_branch
    %12 = sbr.rel target = $region3
  $region8: #{discriminator_head.1} parent=0 // loop_exit
    _

</llo_original>
